<compile_context>
chip_gen: v5e
topology: v5e:2x2
jax: 0.10.0
libtpu: 0.0.40
codegen_flags: <defaults>
</compile_context>

<pallas_src>
import functools
import math

import jax
import jax.numpy as jnp
from jax.experimental import pallas as pl
from jax.experimental.pallas import tpu as pltpu


def _cdiv(a, b):
    return -(-a // b)


def _pick_time_packing(bd):
    """Time-steps packed per row so the lane dim is (a multiple of) 128."""
    if bd >= 128:
        return 1
    if 128 % bd == 0:
        return 128 // bd                     # L == 128 exactly (common case)
    k = 128 // math.gcd(bd, 128)             # smallest k with (k*bd) % 128 == 0
    return k if k * bd <= 1024 else 1        # fall back to un-packed layout


# ----------------------------- Pallas kernel --------------------------------
def _abs_time_diff_kernel(x_ref, out_ref, acc_ref, corr_ref, carry_ref,
                          *, bd, lanes, tt):
    # x_ref     : (tt, lanes) native dtype; lanes = k*bd, each row holds k
    #             consecutive time steps of bd features (flat, contiguous).
    # out_ref   : (1,) f32 SMEM  -> sum over t of |s[t+1] - s[t]| (all elems)
    # acc_ref   : (8, lanes) f32 VMEM  per-lane partial sums (circular diffs)
    # corr_ref  : (1, bd)    f32 VMEM  wrap/cross-row correction partial sums
    # carry_ref : (1, bd)    f32 VMEM  last time step of the previous chunk
    i = pl.program_id(0)
    last = pl.num_programs(0) - 1

    x = x_ref[...].astype(jnp.float32)                 # (tt, lanes)
    first = x[:, :bd]                                  # first time step / row
    tail = x[:, lanes - bd:]                           # last  time step / row

    @pl.when(i == 0)
    def _init():
        acc_ref[...] = jnp.zeros_like(acc_ref)
        corr_ref[...] = jnp.zeros_like(corr_ref)
        carry_ref[...] = first[0:1, :]                 # chunk-0 boundary -> 0

    if bd < lanes:
        # (1) circular in-row diffs at lane distance bd.  The *sum* of
        # |x - roll(x, bd)| is identical for either roll direction, so this is
        # robust and stays on the XLU slot.  It over-counts exactly one
        # spurious pair per row (row-first vs row-last time step) ...
        rolled = pltpu.roll(x, bd, axis=1)
        d = jnp.abs(x - rolled)                        # (tt, lanes)
        acc_ref[...] += jnp.sum(d.reshape(tt // 8, 8, lanes), axis=0)
        # ... which is subtracted here (narrow: (tt, bd) only).
        corr_ref[...] -= jnp.sum(jnp.abs(first - tail), axis=0, keepdims=True)

    # (2) pairs that cross a packed row: first step of row r vs last step of
    #     row r-1 (and, for r == 0, the previous chunk's carried last step).
    corr_ref[...] += (
        jnp.abs(first[0:1, :] - carry_ref[...])
        + jnp.sum(jnp.abs(first[1:, :] - tail[:-1, :]), axis=0, keepdims=True))

    carry_ref[...] = tail[tt - 1:tt, :]

    @pl.when(i == last)
    def _finalize():
        out_ref[0] = jnp.sum(acc_ref[...]) + jnp.sum(corr_ref[...])


def _abs_time_diff_sum(x2d, max_rows_per_chunk):
    """sum_{t,j} |x2d[t+1, j] - x2d[t, j]| via the lane-packed Pallas kernel."""
    T, BD = x2d.shape
    itemsize = jnp.dtype(x2d.dtype).itemsize
    pack = 8 * max(1, 4 // itemsize)          # sublane packing: 8/16/32 rows
    k = _pick_time_packing(BD)
    L = k * BD                                # lane width of the packed view

    # Chunk sizing: large tiles (amortize ~0.35us/step) but bounded so the
    # double-buffered input + f32 temporaries stay well inside scoped VMEM.
    row_bytes = L * itemsize
    budget = 512 * 1024 * itemsize            # native bytes per chunk
    tt_cap = max(pack, min(max_rows_per_chunk, budget // max(1, row_bytes)))
    tt_cap -= tt_cap % pack

    R = _cdiv(T, k)                           # rows holding the real data
    num_chunks = _cdiv(R, tt_cap)
    tt = _cdiv(_cdiv(R, num_chunks), pack) * pack   # balanced chunks
    R_pad = num_chunks * tt
    T_pad = R_pad * k

    if T_pad != T:
        # Edge-replicate the last time step: every padded diff is exactly 0,
        # so the kernel needs no masking.  (This is a wrapper-side copy.)
        pad = jnp.broadcast_to(x2d[T - 1:T, :], (T_pad - T, BD))
        x2d = jnp.concatenate([x2d, pad], axis=0)
    x_packed = x2d.reshape(R_pad, L)          # contiguous -> free reshape

    kernel = functools.partial(_abs_time_diff_kernel, bd=BD, lanes=L, tt=tt)
    out = pl.pallas_call(
        kernel,
        out_shape=jax.ShapeDtypeStruct((1,), jnp.float32),
        grid_spec=pltpu.PrefetchScalarGridSpec(
            num_scalar_prefetch=0,
            grid=(num_chunks,),
            in_specs=[pl.BlockSpec((tt, L), lambda i: (i, 0))],
            out_specs=pl.BlockSpec((1,), lambda i: (0,),
                                   memory_space=pltpu.MemorySpace.SMEM),
            scratch_shapes=[
                pltpu.VMEM((8, L), jnp.float32),   # circular-diff accumulator
                pltpu.VMEM((1, BD), jnp.float32),  # wrap/cross-row corrections
                pltpu.VMEM((1, BD), jnp.float32),  # carry: prev chunk tail
            ],
        ),
        compiler_params=pltpu.CompilerParams(
            dimension_semantics=("arbitrary",),     # carry -> sequential
            vmem_limit_bytes=40 * 1024 * 1024),
    )(x_packed)
    return out[0]


def prob_smooth_loss(mask_logits, smooth_src, *, max_rows_per_chunk=8192):
    """Pallas ProbSmoothLoss.forward: mean of the broadcast `probs`.

    NaNs in the inputs propagate into the returned scalar (check
    jnp.isnan(result) host-side if the torch ValueError behaviour is needed).
    """
    B, T = mask_logits.shape
    Ts, Bs, D = smooth_src.shape
    if Ts != T or Bs != B:
        raise ValueError("mask_logits (B,T) must match smooth_src (T,B,D)")
    if T < 2:
        raise ValueError("ProbSmoothLoss needs at least 2 timesteps")
    BD = B * D

    # lp term: tiny, lane-misaligned slices -> plain XLA in the wrapper.
    lg = mask_logits.astype(jnp.float32)
    lp_mean = jnp.mean(lg[:, 1:] * lg[:, :-1])

    diff_sum = _abs_time_diff_sum(smooth_src.reshape(T, BD), max_rows_per_chunk)
    # mean(broadcast(lp) + broadcast(|dt s|)) == mean(lp) + mean(|dt s|)
    return lp_mean + diff_sum * jnp.float32(1.0 / ((T - 1) * BD))


# --------------------------- Module-level wrapper ----------------------------
class InterpretabilityCriterion:
    """JAX/Pallas port of txai InterpretabilityCriterion.forward (jit-able)."""

    def __init__(self, r, lam=1.0):
        self.r = r
        self.lam = lam

    def __call__(self, src, times, out_dict):
        mask = out_dict['mask_logits']
        smooth_src = out_dict['smooth_src']
        # NOTE: the torch module prints isnan(smooth_src).sum() and raises on
        # NaN probs; both force blocking host syncs, so they are dropped here
        # and NaNs propagate into the returned scalar.
        # TODO(synk): GSATLoss_Extended / ConnectLoss_Extended definitions were
        #             not provided in the reference source; they contribute 0.
        gsat = jnp.float32(0.0)
        mask_connected = jnp.float32(0.0)
        smooth = prob_smooth_loss(mask, smooth_src)
        return gsat + mask_connected + jnp.float32(self.lam) * smooth


# ------------------------------- Example run ---------------------------------
if __name__ == "__main__":
    key = jax.random.PRNGKey(0)
    k1, k2, k3, k4 = jax.random.split(key, 4)

    # --- test 1: small shapes, single chunk, checked against the faithful
    #             torch-style broadcast reference ----------------------------
    B, T, D = 8, 16, 1
    mask_logits = jax.random.uniform(k1, (B, T), dtype=jnp.float32)
    smooth_src = jax.random.normal(k2, (T, B, D), dtype=jnp.float32)
    src = jnp.zeros((T, B, D), jnp.float32)
    times = jnp.broadcast_to(jnp.arange(T, dtype=jnp.float32)[:, None], (T, B))
    out_dict = {
        'smoother_stats': jnp.zeros((B, T), jnp.float32),
        'mask_logits': mask_logits,
        'smooth_src': smooth_src,
    }

    criterion = InterpretabilityCriterion(r=0.5, lam=1.0)
    loss = jax.block_until_ready(criterion(src, times, out_dict))

    lp_ref = mask_logits[:, 1:] * mask_logits[:, :-1]             # (B, T-1)
    diff_ref = jnp.sqrt((smooth_src[1:] - smooth_src[:-1]) ** 2)  # (T-1, B, 1)
    ref = jnp.mean(lp_ref + diff_ref)                             # broadcast mean
    assert jnp.allclose(loss, ref, atol=1e-5, rtol=1e-5), (loss, ref)

    # --- test 2: multi-chunk time grid (forced small chunks) + edge padding +
    #             bf16 input (carry, corrections, in-kernel upcast) ----------
    B2, T2, D2 = 4, 1040, 1
    logits2 = jax.random.uniform(k3, (B2, T2), dtype=jnp.float32)
    smooth2 = jax.random.normal(k4, (T2, B2, D2), dtype=jnp.bfloat16)
    got2 = jax.block_until_ready(
        prob_smooth_loss(logits2, smooth2, max_rows_per_chunk=16))
    s2 = smooth2.astype(jnp.float32)
    ref2 = (jnp.mean(logits2[:, 1:] * logits2[:, :-1])
            + jnp.mean(jnp.abs(s2[1:] - s2[:-1])))
    assert jnp.allclose(got2, ref2, atol=1e-4, rtol=1e-4), (got2, ref2)

    print("KERNEL_OK")
</pallas_src>

<mosaic_0001>
module attributes {stable_mosaic.version = 11 : i64} {
  func.func @_abs_time_diff_kernel(%arg0: i32, %arg1: memref<8x128xf32, #tpu.memory_space<vmem>>, %arg2: memref<1xf32, #tpu.memory_space<smem>>, %arg3: memref<8x128xf32, #tpu.memory_space<vmem>>, %arg4: memref<1x8xf32, #tpu.memory_space<vmem>>, %arg5: memref<1x8xf32, #tpu.memory_space<vmem>>) attributes {dimension_semantics = [#tpu.dimension_semantics<arbitrary>], iteration_bounds = array<i64: 1>, scalar_prefetch = 0 : i64, scratch_operands = 3 : i64, tpu.core_type = #tpu.core_type<tc>, window_params = [{transform_indices = @transform_0, window_bounds = array<i64: 8, 128>}, {transform_indices = @transform_1, window_bounds = array<i64: 1>}]} {
    %c0 = arith.constant 0 : index
    %c0_0 = arith.constant 0 : index
    %0 = vector.load %arg1[%c0, %c0_0] : memref<8x128xf32, #tpu.memory_space<vmem>>, vector<8x128xf32>
    %1 = vector.extract_strided_slice %0 {offsets = [0, 0], sizes = [8, 8], strides = [1, 1]} : vector<8x128xf32> to vector<8x8xf32>
    %2 = vector.extract_strided_slice %0 {offsets = [0, 120], sizes = [8, 8], strides = [1, 1]} : vector<8x128xf32> to vector<8x8xf32>
    %c0_i32 = arith.constant 0 : i32
    %3 = arith.cmpi eq, %arg0, %c0_i32 : i32
    %4 = arith.extui %3 : i1 to i32
    %c0_i32_1 = arith.constant 0 : i32
    %5 = arith.cmpi ne, %4, %c0_i32_1 : i32
    scf.if %5 {
      %cst_22 = arith.constant 0.000000e+00 : f32
      %40 = vector.broadcast %cst_22 : f32 to vector<8x128xf32>
      %c0_23 = arith.constant 0 : index
      %c0_24 = arith.constant 0 : index
      %41 = vector.load %arg3[%c0_23, %c0_24] : memref<8x128xf32, #tpu.memory_space<vmem>>, vector<8x128xf32>
      tpu.vector_store %arg3[%c0_23, %c0_24], %40 {strides = array<i32>} : memref<8x128xf32, #tpu.memory_space<vmem>>, vector<8x128xf32>,
      %cst_25 = arith.constant 0.000000e+00 : f32
      %42 = vector.broadcast %cst_25 : f32 to vector<1x8xf32>
      %c0_26 = arith.constant 0 : index
      %c0_27 = arith.constant 0 : index
      %43 = vector.load %arg4[%c0_26, %c0_27] : memref<1x8xf32, #tpu.memory_space<vmem>>, vector<1x8xf32>
      tpu.vector_store %arg4[%c0_26, %c0_27], %42 {strides = array<i32>} : memref<1x8xf32, #tpu.memory_space<vmem>>, vector<1x8xf32>,
      %44 = vector.extract_strided_slice %1 {offsets = [0, 0], sizes = [1, 8], strides = [1, 1]} : vector<8x8xf32> to vector<1x8xf32>
      %c0_28 = arith.constant 0 : index
      %c0_29 = arith.constant 0 : index
      %45 = vector.load %arg5[%c0_28, %c0_29] : memref<1x8xf32, #tpu.memory_space<vmem>>, vector<1x8xf32>
      tpu.vector_store %arg5[%c0_28, %c0_29], %44 {strides = array<i32>} : memref<1x8xf32, #tpu.memory_space<vmem>>, vector<1x8xf32>,
    } else {
    }
    %c8_i32 = arith.constant 8 : i32
    %6 = tpu.dynamic_rotate %0 by %c8_i32 dim 1 : vector<8x128xf32>, i32 -> vector<8x128xf32>
    %7 = arith.subf %0, %6 : vector<8x128xf32>
    %8 = math.absf %7 : vector<8x128xf32>
    %c0_2 = arith.constant 0 : index
    %c0_3 = arith.constant 0 : index
    %9 = vector.load %arg3[%c0_2, %c0_3] : memref<8x128xf32, #tpu.memory_space<vmem>>, vector<8x128xf32>
    %10 = vector.shape_cast %8 : vector<8x128xf32> to vector<1x8x128xf32>
    %cst = arith.constant dense<0.000000e+00> : vector<8x128xf32>
    %11 = vector.multi_reduction <add>, %10, %cst [0] : vector<1x8x128xf32> to vector<8x128xf32>
    %12 = arith.addf %9, %11 : vector<8x128xf32>
    %c0_4 = arith.constant 0 : index
    %c0_5 = arith.constant 0 : index
    %13 = vector.load %arg3[%c0_4, %c0_5] : memref<8x128xf32, #tpu.memory_space<vmem>>, vector<8x128xf32>
    tpu.vector_store %arg3[%c0_4, %c0_5], %12 {strides = array<i32>} : memref<8x128xf32, #tpu.memory_space<vmem>>, vector<8x128xf32>,
    %c0_6 = arith.constant 0 : index
    %c0_7 = arith.constant 0 : index
    %14 = vector.load %arg4[%c0_6, %c0_7] : memref<1x8xf32, #tpu.memory_space<vmem>>, vector<1x8xf32>
    %15 = arith.subf %1, %2 : vector<8x8xf32>
    %16 = math.absf %15 : vector<8x8xf32>
    %cst_8 = arith.constant dense<0.000000e+00> : vector<8xf32>
    %17 = vector.multi_reduction <add>, %16, %cst_8 [0] : vector<8x8xf32> to vector<8xf32>
    %18 = vector.shape_cast %17 : vector<8xf32> to vector<1x8xf32>
    %19 = arith.subf %14, %18 : vector<1x8xf32>
    %c0_9 = arith.constant 0 : index
    %c0_10 = arith.constant 0 : index
    %20 = vector.load %arg4[%c0_9, %c0_10] : memref<1x8xf32, #tpu.memory_space<vmem>>, vector<1x8xf32>
    tpu.vector_store %arg4[%c0_9, %c0_10], %19 {strides = array<i32>} : memref<1x8xf32, #tpu.memory_space<vmem>>, vector<1x8xf32>,
    %c0_11 = arith.constant 0 : index
    %c0_12 = arith.constant 0 : index
    %21 = vector.load %arg4[%c0_11, %c0_12] : memref<1x8xf32, #tpu.memory_space<vmem>>, vector<1x8xf32>
    %22 = vector.extract_strided_slice %1 {offsets = [0, 0], sizes = [1, 8], strides = [1, 1]} : vector<8x8xf32> to vector<1x8xf32>
    %c0_13 = arith.constant 0 : index
    %c0_14 = arith.constant 0 : index
    %23 = vector.load %arg5[%c0_13, %c0_14] : memref<1x8xf32, #tpu.memory_space<vmem>>, vector<1x8xf32>
    %24 = arith.subf %22, %23 : vector<1x8xf32>
    %25 = math.absf %24 : vector<1x8xf32>
    %26 = vector.extract_strided_slice %1 {offsets = [1, 0], sizes = [7, 8], strides = [1, 1]} : vector<8x8xf32> to vector<7x8xf32>
    %27 = vector.extract_strided_slice %2 {offsets = [0, 0], sizes = [7, 8], strides = [1, 1]} : vector<8x8xf32> to vector<7x8xf32>
    %28 = arith.subf %26, %27 : vector<7x8xf32>
    %29 = math.absf %28 : vector<7x8xf32>
    %cst_15 = arith.constant dense<0.000000e+00> : vector<8xf32>
    %30 = vector.multi_reduction <add>, %29, %cst_15 [0] : vector<7x8xf32> to vector<8xf32>
    %31 = vector.shape_cast %30 : vector<8xf32> to vector<1x8xf32>
    %32 = arith.addf %25, %31 : vector<1x8xf32>
    %33 = arith.addf %21, %32 : vector<1x8xf32>
    %c0_16 = arith.constant 0 : index
    %c0_17 = arith.constant 0 : index
    %34 = vector.load %arg4[%c0_16, %c0_17] : memref<1x8xf32, #tpu.memory_space<vmem>>, vector<1x8xf32>
    tpu.vector_store %arg4[%c0_16, %c0_17], %33 {strides = array<i32>} : memref<1x8xf32, #tpu.memory_space<vmem>>, vector<1x8xf32>,
    %35 = vector.extract_strided_slice %2 {offsets = [7, 0], sizes = [1, 8], strides = [1, 1]} : vector<8x8xf32> to vector<1x8xf32>
    %c0_18 = arith.constant 0 : index
    %c0_19 = arith.constant 0 : index
    %36 = vector.load %arg5[%c0_18, %c0_19] : memref<1x8xf32, #tpu.memory_space<vmem>>, vector<1x8xf32>
    tpu.vector_store %arg5[%c0_18, %c0_19], %35 {strides = array<i32>} : memref<1x8xf32, #tpu.memory_space<vmem>>, vector<1x8xf32>,
    %c0_i32_20 = arith.constant 0 : i32
    %37 = arith.cmpi eq, %arg0, %c0_i32_20 : i32
    %38 = arith.extui %37 : i1 to i32
    %c0_i32_21 = arith.constant 0 : i32
    %39 = arith.cmpi ne, %38, %c0_i32_21 : i32
    scf.if %39 {
      %c0_22 = arith.constant 0 : index
      %c0_23 = arith.constant 0 : index
      %40 = vector.load %arg3[%c0_22, %c0_23] : memref<8x128xf32, #tpu.memory_space<vmem>>, vector<8x128xf32>
      %41 = vector.shape_cast %40 : vector<8x128xf32> to vector<1x8x128xf32>
      %cst_24 = arith.constant dense<0.000000e+00> : vector<1xf32>
      %42 = vector.multi_reduction <add>, %41, %cst_24 [1, 2] : vector<1x8x128xf32> to vector<1xf32>
      %43 = vector.shape_cast %42 : vector<1xf32> to vector<1x1x1xf32>
      %44 = vector.extract %43[0, 0, 0] : f32 from vector<1x1x1xf32>
      %c0_25 = arith.constant 0 : index
      %c0_26 = arith.constant 0 : index
      %45 = vector.load %arg4[%c0_25, %c0_26] : memref<1x8xf32, #tpu.memory_space<vmem>>, vector<1x8xf32>
      %46 = vector.shape_cast %45 : vector<1x8xf32> to vector<1x1x8xf32>
      %cst_27 = arith.constant dense<0.000000e+00> : vector<1xf32>
      %47 = vector.multi_reduction <add>, %46, %cst_27 [1, 2] : vector<1x1x8xf32> to vector<1xf32>
      %48 = vector.shape_cast %47 : vector<1xf32> to vector<1x1x1xf32>
      %49 = vector.extract %48[0, 0, 0] : f32 from vector<1x1x1xf32>
      %50 = arith.addf %44, %49 : f32
      %c0_28 = arith.constant 0 : index
      %51 = memref.load %arg2[%c0_28] : memref<1xf32, #tpu.memory_space<smem>>
      memref.store %50, %arg2[%c0_28] : memref<1xf32, #tpu.memory_space<smem>>
    } else {
    }
    return
  }
  func.func @transform_0(%arg0: i32) -> (i32, i32) {
    %c0_i32 = arith.constant 0 : i32
    %c0_i32_0 = arith.constant 0 : i32
    return %arg0, %c0_i32 : i32, i32
  }
  func.func @transform_1(%arg0: i32) -> i32 {
    %c0_i32 = arith.constant 0 : i32
    %c0_i32_0 = arith.constant 0 : i32
    return %c0_i32 : i32
  }
}

</mosaic_0001>

<llo_original>
// kernel: tpu_custom_call.1
$region0: #{tpu_custom_call.1}
  #allocation0 [shape = 'u32[]', space=smem, size = 0x4, offset = 0x4, fixed_abs, tag = 'smem constant byte address 0x4 - core index']
  #allocation1 [shape = 'u32[72,128]{1,0:T(1,128)}', space=vmem, size = 0x9000, scoped, tag = 'internal scratch']
  #allocation2 [shape = 'f32[8,128]{1,0:T(8,128)}', space=vmem, size = 0x1000, scoped, tag = 'scratch operand']
  #allocation3 [shape = 'f32[1,8]{1,0:T(1,128)}', space=vmem, size = 0x200, scoped, tag = 'scratch operand']
  #allocation4 [shape = 'f32[1,8]{1,0:T(1,128)}', space=vmem, size = 0x200, scoped, tag = 'scratch operand']
  %s0 = inlined_call_operand.hbm [shape: f32[8,128], index: 0, kind: input, shape index: {}]
  %s1 = inlined_call_operand.hbm [shape: f32[1], index: 1, kind: output, shape index: {}]
  %s2 = sld [smem:[#allocation0]]
  $region26: #{tpu_custom_call.1} parent=0
    _
  %s4 = ssub.s32 1, %s2
  %s5 = scalar_select 0, %s4, %s2
  $region1: #{tpu_custom_call.1} parent=0
    #allocation5 [shape = 'u8[4096]{0}', space=vmem, size = 0x1000, scoped, tag = 'input window, operand 0, single buffered']
    #allocation6 [shape = 's32[1]{0}', space=sflag, size = 0x4, scoped, tag = 'scoped memory for tpu_custom_call.1']
    #allocation7 [shape = 's32[1]{0}', space=sflag, size = 0x4, scoped, tag = 'scoped memory for tpu_custom_call.1']
    #allocation8 [shape = 'u8[512]{0}', space=smem, size = 0x200, scoped, tag = 'output window, operand 0, single buffered']
    %6 = vsyncpa [#allocation6], 0
    %7 = vsyncpa [#allocation7], 0
    // Predicated region
    $region2: #{tpu_custom_call.1} parent=1 // pred_check
      _
    $region3: #{tpu_custom_call.1} parent=1 // pred_check_branch
      %9 = sbr.rel (0) target = $region5
    $region4: #{tpu_custom_call.1} parent=1 // pred_region
      %11 = vsyncadd [#allocation6], 0
      %s13 = sshll.u32 %s0, 4
      %s14 = int_to_ptr.hbm [resolvable:$true] %s13
      %s15 = sshll.u32 [#allocation5], 4
      %s16 = int_to_ptr.vmem [resolvable:$true] %s15
      %18 = dma.hbm_to_vmem [thread:$0]  %s14, 128, %s16, [#allocation6]
    $region5: #{tpu_custom_call.1} parent=1 // pred_fallthru
      _
    // Predicated region
    $region6: #{tpu_custom_call.1} parent=1 // pred_check
      _
    $region7: #{tpu_custom_call.1} parent=1 // pred_check_branch
      %20 = sbr.rel (0) target = $region9
    $region8: #{tpu_custom_call.1} parent=1 // pred_region
      %22 = dma.done [#allocation6], 128
    $region9: #{tpu_custom_call.1} parent=1 // pred_fallthru
      _
    %v23 = vld [vmem:[#allocation5] sm:$0xff]
    %p24 = scmp.eq.s32.totalorder 0, 0
    // Predicated region
    $region10: #{tpu_custom_call.1} parent=1 // pred_check
      %p25 = pneg %p24
    $region11: #{tpu_custom_call.1} parent=1 // pred_check_branch
      %27 = sbr.rel (%p25) target = $region13
    $region12: #{tpu_custom_call.1} parent=1 // pred_region
      %28 = vst [vmem:[#allocation2] sm:$0xff] 0.0
      %vm29 = vcmask 57344
      %30 = vst.msk [vmem:[#allocation3] sm:$0x1] %vm29, 0.0
      %31 = vst.msk [vmem:[#allocation4] sm:$0x1] %vm29, %v23
    $region13: #{tpu_custom_call.1} parent=1 // pred_fallthru
      _
    %32 = vrot.lane.b32.xlu0 %v23, 8
    %v33 = vpop.permute.xlu0 %32
    %v34 = vsub.f32 %v23, %v33
    %v35 = vand.u32 2147483647, %v34
    %v36 = vld [vmem:[#allocation2] sm:$0xff]
    %v37 = vadd.f32 %v35, 0.0
    %v38 = vadd.f32 %v36, %v37
    %39 = vst [vmem:[#allocation2] sm:$0xff] %v38
    %v40 = vld [vmem:[#allocation3] sm:$0x1]
    %42 = vrot.lane.b32.xlu0 %v23, 8
    %v43 = vpop.permute.xlu0 %42
    %v45 = vsub.f32 %v23, %v43
    %v46 = vand.u32 2147483647, %v45
    %vm47 = vcmask 64512
    %v48 = vsel %vm47, %v46, 0.0
    %v49 = vrot.slane %v48, 4
    %v50 = vadd.f32 %v48, %v49
    %v51 = vrot.slane %v50, 2
    %v52 = vadd.f32 %v50, %v51
    %v53 = vrot.slane %v52, 1
    %v54 = vadd.f32 %v52, %v53
    %v55 = vsub.f32 %v40, %v54
    %vm56 = vcmask 57344
    %57 = vst.msk [vmem:[#allocation3] sm:$0x1] %vm56, %v55
    %v58 = vld [vmem:[#allocation3] sm:$0x1]
    %v59 = vld [vmem:[#allocation4] sm:$0x1]
    %v60 = vsub.f32 %v23, %v59
    %v61 = vand.u32 2147483647, %v60
    %v62 = vrot.slane %v23, 7
    %63 = vrot.lane.b32.xlu0 %v62, 8
    %v64 = vpop.permute.xlu0 %63
    %v66 = vsub.f32 %v23, %v64
    %v67 = vand.u32 2147483647, %v66
    %v69 = vrot.slane %v67, 1
    %vm71 = vcmask 63488
    %v72 = vsel %vm71, %v69, 0.0
    %v73 = vrot.slane %v72, 4
    %v74 = vadd.f32 %v72, %v73
    %v75 = vrot.slane %v74, 2
    %v76 = vadd.f32 %v74, %v75
    %v77 = vrot.slane %v76, 1
    %v78 = vadd.f32 %v76, %v77
    %v79 = vadd.f32 %v61, %v78
    %v80 = vadd.f32 %v58, %v79
    %81 = vst.msk [vmem:[#allocation3] sm:$0x1] %vm56, %v80
    %vm82 = vcmask 64519
    %83 = vst.msk [vmem:[#allocation4 - $0x7] sm:$0x80] %vm82, %v43
    // Predicated region
    $region14: #{tpu_custom_call.1} parent=1 // pred_check
      %p84 = pneg %p24
    $region15: #{tpu_custom_call.1} parent=1 // pred_check_branch
      %86 = sbr.rel (%p84) target = $region17
    $region16: #{tpu_custom_call.1} parent=1 // pred_region
      %v87 = vld [vmem:[#allocation2] sm:$0xff]
      %88 = vadd.xlane.f32.xlu0 %v87
      %v89 = vpop.xlane.xlu0 %88
      %v90 = vrot.slane %v89, 4
      %v91 = vadd.f32 %v89, %v90
      %v92 = vrot.slane %v91, 2
      %v93 = vadd.f32 %v91, %v92
      %v94 = vrot.slane %v93, 1
      %v95 = vadd.f32 %v93, %v94
      %s96 = vtos %v95
      %v97 = vld [vmem:[#allocation3] sm:$0x1]
      %v98 = vsel %vm56, %v97, 0.0
      %99 = vadd.xlane.f32.xlu0 %v98
      %v100 = vpop.xlane.xlu0 %99
      %v101 = vrot.slane %v100, 4
      %v102 = vadd.f32 %v100, %v101
      %v103 = vrot.slane %v102, 2
      %v104 = vadd.f32 %v102, %v103
      %v105 = vrot.slane %v104, 1
      %v106 = vadd.f32 %v104, %v105
      %s107 = vtos %v106
      %s108 = sadd.f32 %s96, %s107
      %s109 = scalar_lea.smem [#allocation8], 0
      %110 = sst [smem:[%s109]] %s108
    $region17: #{tpu_custom_call.1} parent=1 // pred_fallthru
      _
    // Predicated region
    $region18: #{tpu_custom_call.1} parent=1 // pred_check
      _
    $region19: #{tpu_custom_call.1} parent=1 // pred_check_branch
      %112 = sbr.rel (0) target = $region21
    $region20: #{tpu_custom_call.1} parent=1 // pred_region
      %114 = vsyncadd [#allocation7], 0
      %s116 = sshll.u32 %s1, 4
      %s117 = int_to_ptr.hbm [resolvable:$true] %s116
      %119 = dma.smem_to_hbm [#allocation8], 16, %s117, [#allocation7]
    $region21: #{tpu_custom_call.1} parent=1 // pred_fallthru
      _
    // Predicated region
    $region22: #{tpu_custom_call.1} parent=1 // pred_check
      _
    $region23: #{tpu_custom_call.1} parent=1 // pred_check_branch
      %121 = sbr.rel (0) target = $region25
    $region24: #{tpu_custom_call.1} parent=1 // pred_region
      %123 = dma.done [#allocation7], 16
    $region25: #{tpu_custom_call.1} parent=1 // pred_fallthru
      _
    %124 = sfence
    %125 = vsyncpa [#allocation6], 1
    %126 = vsyncpa [#allocation7], 1

</llo_original>
